<compile_context>
chip_gen: v5e
topology: v5e:2x2
jax: 0.10.0
libtpu: 0.0.40
codegen_flags: <defaults>
</compile_context>

<pallas_src>
import functools

import jax
import jax.numpy as jnp
from jax.experimental import pallas as pl
from jax.experimental.pallas import tpu as pltpu


def _round_up(x, m):
    return ((x + m - 1) // m) * m


def _combiner_kernel(init_ref, bias_ref, w1_ref, gamma_ref, beta_ref, out_ref,
                     *, h_true):
    # init_ref:  (TB, Np, Hp)  block of (padded) init_h
    # bias_ref:  (TB, 1,  Hp)  precomputed pooled@W2 + proj_b per batch elem (f32)
    # w1_ref:    (Hp, Hp)      padded W.T[:H] (acts on init_h), resident
    # gamma_ref: (1, 1, Hp)    padded LayerNorm weight
    # beta_ref:  (1, 1, Hp)    padded LayerNorm bias
    # out_ref:   (TB, Np, Hp)
    tb, n, hp = init_ref.shape

    # Flatten (TB, Np) -> rows so the MXU sees a large M.  Np % 8 == 0 and
    # Hp % 128 == 0 are guaranteed wrapper-side, so this reshape is layout-free.
    x = init_ref[...].reshape(tb * n, hp)
    proj = jnp.dot(x, w1_ref[...], preferred_element_type=jnp.float32)
    proj = proj.reshape(tb, n, hp) + bias_ref[...].astype(jnp.float32)

    # One-pass LayerNorm over the true (unpadded) H.  Padded lanes of `proj`
    # are exactly zero (zero-padded w1 columns and bias), so sums with the true
    # divisor give the exact unpadded statistics:  var = E[x^2] - mu^2.
    inv_h = 1.0 / float(h_true)
    s1 = jnp.sum(proj, axis=-1, keepdims=True)
    s2 = jnp.sum(proj * proj, axis=-1, keepdims=True)
    mu = s1 * inv_h
    var = s2 * inv_h - mu * mu
    normed = (proj - mu) * jax.lax.rsqrt(var + 1e-5)
    out_ref[...] = (normed * gamma_ref[...].astype(jnp.float32)
                    + beta_ref[...].astype(jnp.float32)).astype(out_ref.dtype)


def _tpu_generation():
    """Return (tensorcores_per_chip, scoped-VMEM ceiling bytes); conservative fallback."""
    vmem_cap = 64 * 2**20          # conservative default: v7x per-TC VMEM
    n_tc = 1
    try:
        vmem_cap = int(pltpu.get_tpu_info().vmem_capacity_bytes)
    except Exception:
        pass
    try:
        kind = jax.devices()[0].device_kind.lower()
        if "v7" in kind or "7x" in kind:
            n_tc = 2               # v7x: 2 TensorCores per chip
    except Exception:
        pass
    # Leave headroom for compiler-internal scratch: ~48 MiB on 64-MiB parts
    # (v7x), ~96 MiB on 128-MiB parts (v5e/v6e).
    ceiling = int(min(96 * 2**20, (vmem_cap * 3) // 4))
    return n_tc, ceiling


def batch_processing_combiner(init_h, llama_embeddings, proj_w, proj_b,
                              ln_gamma, ln_beta):
    """proj_w: (H, 2H) like nn.Linear(2H, H).weight; proj_b/ln_*: (H,)."""
    B_init, N, H = init_h.shape
    B_llama, S, H2 = llama_embeddings.shape
    assert H == H2
    chunk = min(B_init, B_llama)

    # ---- hoisted (plain XLA): llama mean-pool + pooled half of the projection
    wT = proj_w.T                                   # (2H, H)
    w1 = wT[:H, :]                                  # (H, H)  -> kernel
    w2 = wT[H:, :].astype(jnp.float32)              # (H, H)  -> hoisted
    pooled = jnp.mean(llama_embeddings[:chunk].astype(jnp.float32), axis=1)
    per_b_bias = pooled @ w2 + proj_b.astype(jnp.float32)   # (chunk, H)
    idx = jnp.arange(B_init) % chunk
    bias_full = per_b_bias[idx][:, None, :]                  # (B_init, 1, H)

    # ---- lane/sublane-dense padding (wrapper-side, only when needed)
    Hp = max(128, _round_up(H, 128))
    Np = _round_up(N, 8)
    pad_h, pad_n = Hp - H, Np - N
    if pad_n or pad_h:
        init_p = jnp.pad(init_h, ((0, 0), (0, pad_n), (0, pad_h)))
    else:
        init_p = init_h
    if pad_h:
        w1 = jnp.pad(w1, ((0, pad_h), (0, pad_h)))
        bias_full = jnp.pad(bias_full, ((0, 0), (0, 0), (0, pad_h)))
        g = jnp.pad(ln_gamma, (0, pad_h))
        b = jnp.pad(ln_beta, (0, pad_h))
    else:
        g, b = ln_gamma, ln_beta
    g3 = g.reshape(1, 1, Hp)
    b3 = b.reshape(1, 1, Hp)

    # True bf16 MXU operands when the activations are bf16 (acc stays f32).
    if init_h.dtype == jnp.bfloat16:
        w1 = w1.astype(jnp.bfloat16)

    # ---- generation-aware block-size / grid selection
    n_tc, vmem_ceiling = _tpu_generation()
    in_isz = jnp.dtype(init_p.dtype).itemsize
    out_isz = jnp.dtype(init_h.dtype).itemsize
    resident = Hp * Hp * jnp.dtype(w1.dtype).itemsize + 2 * Hp * 4  # w1 + gamma/beta
    row_bytes = Hp * (in_isz + out_isz) * 2          # init+out, double-buffered
    rows_target = 2048                                # ~0.5-2 MiB per streamed buffer
    max_rows = max(Np, (vmem_ceiling - resident - 2 * 2**20) // row_bytes)
    rows_target = min(rows_target, max_rows)
    tb = min(B_init, max(1, rows_target // Np))
    n_steps = pl.cdiv(B_init, tb)
    if n_tc >= 2 and B_init >= 2 and B_init * Np >= 2 * 512:
        # 2 TCs per chip (v7x): round the grid up to an even number of steps so
        # both cores get balanced work, but never shrink below ~512 rows/block.
        even_steps = max(2, n_steps + (n_steps % 2))
        cand_tb = pl.cdiv(B_init, even_steps)
        if cand_tb * Np >= 512:
            tb = cand_tb
    grid = (pl.cdiv(B_init, tb),)

    blk = tb * Np * Hp
    need = resident + 2 * (blk * in_isz + blk * out_isz + tb * Hp * 4)
    vmem_limit = int(min(vmem_ceiling, max(8 * 2**20, 2 * need)))

    # TODO(synk): on v7x, pipeline_mode=pl.Buffered(1) on the resident
    # w1/gamma/beta specs would reclaim one redundant buffer of VMEM headroom.

    out_full = pl.pallas_call(
        functools.partial(_combiner_kernel, h_true=H),
        out_shape=jax.ShapeDtypeStruct((B_init, Np, Hp), init_h.dtype),
        grid_spec=pltpu.PrefetchScalarGridSpec(
            num_scalar_prefetch=0,
            grid=grid,
            in_specs=[
                pl.BlockSpec((tb, Np, Hp), lambda i: (i, 0, 0)),   # init block
                pl.BlockSpec((tb, 1, Hp), lambda i: (i, 0, 0)),    # per-b bias
                pl.BlockSpec((Hp, Hp), lambda i: (0, 0)),          # w1 (resident)
                pl.BlockSpec((1, 1, Hp), lambda i: (0, 0, 0)),     # gamma
                pl.BlockSpec((1, 1, Hp), lambda i: (0, 0, 0)),     # beta
            ],
            out_specs=pl.BlockSpec((tb, Np, Hp), lambda i: (i, 0, 0)),
        ),
        compiler_params=pltpu.CompilerParams(
            dimension_semantics=("parallel",),
            vmem_limit_bytes=vmem_limit),
    )(init_p, bias_full, w1, g3, b3)

    if pad_n or pad_h:
        return out_full[:, :N, :H]
    return out_full


def reference_combiner(init_h, llama_embeddings, proj_w, proj_b, ln_gamma, ln_beta):
    """Pure-JAX reference mirroring the PyTorch loop exactly."""
    B_init, N, H = init_h.shape
    B_llama, S, _ = llama_embeddings.shape
    chunk = min(B_init, B_llama)
    outs = []
    for i in range(0, B_init, chunk):
        end = min(i + chunk, B_init)
        init_chunk = init_h[i:end]
        if B_llama == B_init:
            llama_chunk = llama_embeddings[i:end]
        else:
            llama_chunk = llama_embeddings[:chunk][: end - i]
        pooled = jnp.mean(llama_chunk, axis=1, keepdims=True)
        expanded = jnp.broadcast_to(pooled, (end - i, N, H))
        cat = jnp.concatenate([init_chunk, expanded], axis=-1)
        proj = cat @ proj_w.T + proj_b
        mu = jnp.mean(proj, axis=-1, keepdims=True)
        var = jnp.mean((proj - mu) ** 2, axis=-1, keepdims=True)
        outs.append((proj - mu) / jnp.sqrt(var + 1e-5) * ln_gamma + ln_beta)
    return jnp.concatenate(outs, axis=0)


if __name__ == "__main__":
    key = jax.random.PRNGKey(0)
    H, N, S = 32, 8, 8

    # Deterministic parameter init (synthetic, not a checkpoint).
    k1, k2, k3, k4, k5, k6 = jax.random.split(key, 6)
    proj_w = jax.random.normal(k1, (H, 2 * H), jnp.float32) * 0.05   # Linear(2H, H).weight
    proj_b = jax.random.normal(k2, (H,), jnp.float32) * 0.01          # Linear bias
    ln_gamma = jnp.ones((H,), jnp.float32)
    ln_beta = jnp.zeros((H,), jnp.float32)

    # Case 1: B_init == B_llama (single aligned chunk).
    ka, kb = jax.random.split(k3)
    init_h = jax.random.normal(ka, (2, N, H), jnp.float32)
    llama = jax.random.normal(kb, (2, S, H), jnp.float32)
    out1 = batch_processing_combiner(init_h, llama, proj_w, proj_b, ln_gamma, ln_beta)
    jax.block_until_ready(out1)
    ref1 = reference_combiner(init_h, llama, proj_w, proj_b, ln_gamma, ln_beta)
    assert jnp.allclose(out1, ref1, atol=1e-4, rtol=1e-4), "mismatch (aligned case)"

    # Case 2: B_init > B_llama (chunked reuse of llama embeddings).
    kc, kd = jax.random.split(k4)
    init_h2 = jax.random.normal(kc, (4, N, H), jnp.float32)
    llama2 = jax.random.normal(kd, (2, S, H), jnp.float32)
    out2 = batch_processing_combiner(init_h2, llama2, proj_w, proj_b, ln_gamma, ln_beta)
    jax.block_until_ready(out2)
    ref2 = reference_combiner(init_h2, llama2, proj_w, proj_b, ln_gamma, ln_beta)
    assert jnp.allclose(out2, ref2, atol=1e-4, rtol=1e-4), "mismatch (chunked case)"

    # Case 3: partial last chunk (B_init=5, B_llama=2).
    ke, kf = jax.random.split(k5)
    init_h3 = jax.random.normal(ke, (5, N, H), jnp.float32)
    llama3 = jax.random.normal(kf, (2, S, H), jnp.float32)
    out3 = batch_processing_combiner(init_h3, llama3, proj_w, proj_b, ln_gamma, ln_beta)
    jax.block_until_ready(out3)
    ref3 = reference_combiner(init_h3, llama3, proj_w, proj_b, ln_gamma, ln_beta)
    assert jnp.allclose(out3, ref3, atol=1e-4, rtol=1e-4), "mismatch (partial chunk case)"

    # Case 4: N not a multiple of 8 (exercises the sublane-padding path).
    kg, kh = jax.random.split(k6)
    init_h4 = jax.random.normal(kg, (3, 7, H), jnp.float32)
    llama4 = jax.random.normal(kh, (2, 5, H), jnp.float32)
    out4 = batch_processing_combiner(init_h4, llama4, proj_w, proj_b, ln_gamma, ln_beta)
    jax.block_until_ready(out4)
    ref4 = reference_combiner(init_h4, llama4, proj_w, proj_b, ln_gamma, ln_beta)
    assert jnp.allclose(out4, ref4, atol=1e-4, rtol=1e-4), "mismatch (N-padding case)"

    # Case 5: bfloat16 activations (exercises the bf16-MXU-operand path).
    init_h5 = init_h2.astype(jnp.bfloat16)
    llama5 = llama2.astype(jnp.bfloat16)
    out5 = batch_processing_combiner(init_h5, llama5, proj_w, proj_b, ln_gamma, ln_beta)
    jax.block_until_ready(out5)
    ref5 = reference_combiner(init_h5, llama5, proj_w, proj_b, ln_gamma, ln_beta)
    assert jnp.allclose(out5.astype(jnp.float32), ref5.astype(jnp.float32),
                        atol=5e-2, rtol=5e-2), "mismatch (bf16 case)"

    print("KERNEL_OK")
</pallas_src>

<mosaic_0001>
module attributes {stable_mosaic.version = 11 : i64} {
  func.func @_combiner_kernel(%arg0: i32, %arg1: memref<2x8x128xf32, #tpu.memory_space<vmem>>, %arg2: memref<2x1x128xf32, #tpu.memory_space<vmem>>, %arg3: memref<128x128xf32, #tpu.memory_space<vmem>>, %arg4: memref<1x1x128xf32, #tpu.memory_space<vmem>>, %arg5: memref<1x1x128xf32, #tpu.memory_space<vmem>>, %arg6: memref<2x8x128xf32, #tpu.memory_space<vmem>>) attributes {dimension_semantics = [#tpu.dimension_semantics<parallel>], iteration_bounds = array<i64: 1>, scalar_prefetch = 0 : i64, scratch_operands = 0 : i64, tpu.core_type = #tpu.core_type<tc>, window_params = [{transform_indices = @transform_0, window_bounds = array<i64: 2, 8, 128>}, {transform_indices = @transform_1, window_bounds = array<i64: 2, 1, 128>}, {pipeline_mode = #tpu.pipeline_mode<synchronous>, transform_indices = @transform_2, window_bounds = array<i64: 128, 128>}, {pipeline_mode = #tpu.pipeline_mode<synchronous>, transform_indices = @transform_3, window_bounds = array<i64: 1, 1, 128>}, {pipeline_mode = #tpu.pipeline_mode<synchronous>, transform_indices = @transform_4, window_bounds = array<i64: 1, 1, 128>}, {transform_indices = @transform_5, window_bounds = array<i64: 2, 8, 128>}]} {
    %c0 = arith.constant 0 : index
    %c0_0 = arith.constant 0 : index
    %c0_1 = arith.constant 0 : index
    %0 = vector.load %arg1[%c0, %c0_0, %c0_1] : memref<2x8x128xf32, #tpu.memory_space<vmem>>, vector<2x8x128xf32>
    %1 = vector.shape_cast %0 : vector<2x8x128xf32> to vector<16x128xf32>
    %c0_2 = arith.constant 0 : index
    %c0_3 = arith.constant 0 : index
    %2 = vector.load %arg3[%c0_2, %c0_3] : memref<128x128xf32, #tpu.memory_space<vmem>>, vector<128x128xf32>
    %cst = arith.constant dense<0.000000e+00> : vector<16x128xf32>
    %3 = tpu.matmul %1, %2, %cst {dimension_numbers = #tpu.dot_dimension_numbers<[1], [0], [0], [1], [0, 0, 1, 1], [], []>} : vector<16x128xf32>, vector<128x128xf32>, vector<16x128xf32> -> vector<16x128xf32>
    %4 = vector.shape_cast %3 : vector<16x128xf32> to vector<2x8x128xf32>
    %c0_4 = arith.constant 0 : index
    %c0_5 = arith.constant 0 : index
    %c0_6 = arith.constant 0 : index
    %5 = vector.load %arg2[%c0_4, %c0_5, %c0_6] : memref<2x1x128xf32, #tpu.memory_space<vmem>>, vector<2x1x128xf32>
    %6 = vector.broadcast %5 : vector<2x1x128xf32> to vector<2x8x128xf32>
    %7 = arith.addf %4, %6 : vector<2x8x128xf32>
    %cst_7 = arith.constant dense<0.000000e+00> : vector<2x8xf32>
    %8 = vector.multi_reduction <add>, %7, %cst_7 [2] : vector<2x8x128xf32> to vector<2x8xf32>
    %9 = vector.shape_cast %8 : vector<2x8xf32> to vector<2x8x1xf32>
    %10 = arith.mulf %7, %7 : vector<2x8x128xf32>
    %cst_8 = arith.constant dense<0.000000e+00> : vector<2x8xf32>
    %11 = vector.multi_reduction <add>, %10, %cst_8 [2] : vector<2x8x128xf32> to vector<2x8xf32>
    %12 = vector.shape_cast %11 : vector<2x8xf32> to vector<2x8x1xf32>
    %cst_9 = arith.constant 3.125000e-02 : f32
    %13 = vector.broadcast %cst_9 : f32 to vector<2x8x1xf32>
    %14 = arith.mulf %9, %13 : vector<2x8x1xf32>
    %cst_10 = arith.constant 3.125000e-02 : f32
    %15 = vector.broadcast %cst_10 : f32 to vector<2x8x1xf32>
    %16 = arith.mulf %12, %15 : vector<2x8x1xf32>
    %17 = arith.mulf %14, %14 : vector<2x8x1xf32>
    %18 = arith.subf %16, %17 : vector<2x8x1xf32>
    %19 = vector.broadcast %14 : vector<2x8x1xf32> to vector<2x8x128xf32>
    %20 = arith.subf %7, %19 : vector<2x8x128xf32>
    %cst_11 = arith.constant 9.99999974E-6 : f32
    %21 = vector.broadcast %cst_11 : f32 to vector<2x8x1xf32>
    %22 = arith.addf %18, %21 : vector<2x8x1xf32>
    %23 = math.rsqrt %22 : vector<2x8x1xf32>
    %24 = vector.broadcast %23 : vector<2x8x1xf32> to vector<2x8x128xf32>
    %25 = arith.mulf %20, %24 : vector<2x8x128xf32>
    %c0_12 = arith.constant 0 : index
    %c0_13 = arith.constant 0 : index
    %c0_14 = arith.constant 0 : index
    %26 = vector.load %arg4[%c0_12, %c0_13, %c0_14] : memref<1x1x128xf32, #tpu.memory_space<vmem>>, vector<1x1x128xf32>
    %27 = vector.broadcast %26 : vector<1x1x128xf32> to vector<2x8x128xf32>
    %28 = arith.mulf %25, %27 : vector<2x8x128xf32>
    %c0_15 = arith.constant 0 : index
    %c0_16 = arith.constant 0 : index
    %c0_17 = arith.constant 0 : index
    %29 = vector.load %arg5[%c0_15, %c0_16, %c0_17] : memref<1x1x128xf32, #tpu.memory_space<vmem>>, vector<1x1x128xf32>
    %30 = vector.broadcast %29 : vector<1x1x128xf32> to vector<2x8x128xf32>
    %31 = arith.addf %28, %30 : vector<2x8x128xf32>
    %c0_18 = arith.constant 0 : index
    %c0_19 = arith.constant 0 : index
    %c0_20 = arith.constant 0 : index
    %32 = vector.load %arg6[%c0_18, %c0_19, %c0_20] : memref<2x8x128xf32, #tpu.memory_space<vmem>>, vector<2x8x128xf32>
    tpu.vector_store %arg6[%c0_18, %c0_19, %c0_20], %31 {strides = array<i32>} : memref<2x8x128xf32, #tpu.memory_space<vmem>>, vector<2x8x128xf32>,
    return
  }
  func.func @transform_0(%arg0: i32) -> (i32, i32, i32) {
    %c0_i32 = arith.constant 0 : i32
    %c0_i32_0 = arith.constant 0 : i32
    %c0_i32_1 = arith.constant 0 : i32
    return %arg0, %c0_i32, %c0_i32_0 : i32, i32, i32
  }
  func.func @transform_1(%arg0: i32) -> (i32, i32, i32) {
    %c0_i32 = arith.constant 0 : i32
    %c0_i32_0 = arith.constant 0 : i32
    %c0_i32_1 = arith.constant 0 : i32
    return %arg0, %c0_i32, %c0_i32_0 : i32, i32, i32
  }
  func.func @transform_2(%arg0: i32) -> (i32, i32) {
    %c0_i32 = arith.constant 0 : i32
    %c0_i32_0 = arith.constant 0 : i32
    %c0_i32_1 = arith.constant 0 : i32
    return %c0_i32, %c0_i32_0 : i32, i32
  }
  func.func @transform_3(%arg0: i32) -> (i32, i32, i32) {
    %c0_i32 = arith.constant 0 : i32
    %c0_i32_0 = arith.constant 0 : i32
    %c0_i32_1 = arith.constant 0 : i32
    %c0_i32_2 = arith.constant 0 : i32
    return %c0_i32, %c0_i32_0, %c0_i32_1 : i32, i32, i32
  }
  func.func @transform_4(%arg0: i32) -> (i32, i32, i32) {
    %c0_i32 = arith.constant 0 : i32
    %c0_i32_0 = arith.constant 0 : i32
    %c0_i32_1 = arith.constant 0 : i32
    %c0_i32_2 = arith.constant 0 : i32
    return %c0_i32, %c0_i32_0, %c0_i32_1 : i32, i32, i32
  }
  func.func @transform_5(%arg0: i32) -> (i32, i32, i32) {
    %c0_i32 = arith.constant 0 : i32
    %c0_i32_0 = arith.constant 0 : i32
    %c0_i32_1 = arith.constant 0 : i32
    return %arg0, %c0_i32, %c0_i32_0 : i32, i32, i32
  }
}

</mosaic_0001>

<llo_original>
// kernel: tpu_custom_call.1
$region0: #{tpu_custom_call.1}
  #allocation0 [shape = 'u32[]', space=smem, size = 0x4, offset = 0x4, fixed_abs, tag = 'smem constant byte address 0x4 - core index']
  #allocation1 [shape = 'u32[72,128]{1,0:T(1,128)}', space=vmem, size = 0x9000, scoped, tag = 'internal scratch']
  %s0 = inlined_call_operand.hbm [shape: f32[2,8,128], index: 0, kind: input, shape index: {}]
  %s1 = inlined_call_operand.hbm [shape: f32[2,1,128], index: 1, kind: input, shape index: {}]
  %s2 = inlined_call_operand.hbm [shape: f32[128,128], index: 2, kind: input, shape index: {}]
  %s3 = inlined_call_operand.vmem [shape: f32[1,1,128], index: 3, kind: input, shape index: {}]
  %s4 = inlined_call_operand.vmem [shape: f32[1,1,128], index: 4, kind: input, shape index: {}]
  %s5 = inlined_call_operand.hbm [shape: f32[2,8,128], index: 5, kind: output, shape index: {}]
  %s6 = sld [smem:[#allocation0]]
  $region42: #{tpu_custom_call.1} parent=0
    _
  %s8 = ssub.s32 1, %s6
  %s9 = scalar_select 0, %s8, %s6
  $region1: #{tpu_custom_call.1} parent=0
    #allocation2 [shape = 'u8[8192]{0}', space=vmem, size = 0x2000, scoped, tag = 'input window, operand 0, single buffered']
    #allocation3 [shape = 's32[1]{0}', space=sflag, size = 0x4, scoped, tag = 'scoped memory for tpu_custom_call.1']
    #allocation4 [shape = 's32[1]{0}', space=sflag, size = 0x4, scoped, tag = 'scoped memory for tpu_custom_call.1']
    #allocation5 [shape = 'u8[1024]{0}', space=vmem, size = 0x400, scoped, tag = 'input window, operand 1, single buffered']
    #allocation6 [shape = 's32[1]{0}', space=sflag, size = 0x4, scoped, tag = 'scoped memory for tpu_custom_call.1']
    #allocation7 [shape = 'u8[65536]{0}', space=vmem, size = 0x10000, scoped, tag = 'input window, operand 2, single buffered']
    #allocation8 [shape = 'u8[8192]{0}', space=vmem, size = 0x2000, scoped, tag = 'output window, operand 0, single buffered']
    %10 = vsyncpa [#allocation3], 0
    %11 = vsyncpa [#allocation6], 0
    %12 = vsyncpa [#allocation4], 0
    // Predicated region
    $region2: #{tpu_custom_call.1} parent=1 // pred_check
      _
    $region3: #{tpu_custom_call.1} parent=1 // pred_check_branch
      %14 = sbr.rel (0) target = $region5
    $region4: #{tpu_custom_call.1} parent=1 // pred_region
      %16 = vsyncadd [#allocation3], 0
      %s17 = sshll.u32 %s0, 4
      %s18 = int_to_ptr.hbm [resolvable:$true] %s17
      %s19 = sshll.u32 [#allocation2], 4
      %s20 = int_to_ptr.vmem [resolvable:$true] %s19
      %25 = dma.hbm_to_vmem [thread:$0]  %s18, 256, %s20, [#allocation3], 128, 128, 8
    $region5: #{tpu_custom_call.1} parent=1 // pred_fallthru
      _
    // Predicated region
    $region6: #{tpu_custom_call.1} parent=1 // pred_check
      _
    $region7: #{tpu_custom_call.1} parent=1 // pred_check_branch
      %27 = sbr.rel (0) target = $region9
    $region8: #{tpu_custom_call.1} parent=1 // pred_region
      %29 = vsyncadd [#allocation6], 0
      %s30 = sshll.u32 %s1, 4
      %s31 = int_to_ptr.hbm [resolvable:$true] %s30
      %s32 = sshll.u32 [#allocation5], 4
      %s33 = int_to_ptr.vmem [resolvable:$true] %s32
      %38 = dma.hbm_to_vmem [thread:$0]  %s31, 32, %s33, [#allocation6], 16, 16, 1
    $region9: #{tpu_custom_call.1} parent=1 // pred_fallthru
      _
    // Predicated region
    $region10: #{tpu_custom_call.1} parent=1 // pred_check
      _
    $region11: #{tpu_custom_call.1} parent=1 // pred_check_branch
      %40 = sbr.rel (0) target = $region13
    $region12: #{tpu_custom_call.1} parent=1 // pred_region
      %42 = vsyncadd [#allocation6], 0
      %s43 = sshll.u32 %s2, 4
      %s44 = int_to_ptr.hbm [resolvable:$true] %s43
      %s45 = sshll.u32 [#allocation7], 4
      %s46 = int_to_ptr.vmem [resolvable:$true] %s45
      %51 = dma.hbm_to_vmem [thread:$0]  %s44, 2048, %s46, [#allocation6], 128, 128, 8
    $region13: #{tpu_custom_call.1} parent=1 // pred_fallthru
      _
    // Predicated region
    $region14: #{tpu_custom_call.1} parent=1 // pred_check
      _
    $region15: #{tpu_custom_call.1} parent=1 // pred_check_branch
      %53 = sbr.rel (0) target = $region17
    $region16: #{tpu_custom_call.1} parent=1 // pred_region
      _
    $region17: #{tpu_custom_call.1} parent=1 // pred_fallthru
      _
    // Predicated region
    $region18: #{tpu_custom_call.1} parent=1 // pred_check
      _
    $region19: #{tpu_custom_call.1} parent=1 // pred_check_branch
      %55 = sbr.rel (0) target = $region21
    $region20: #{tpu_custom_call.1} parent=1 // pred_region
      _
    $region21: #{tpu_custom_call.1} parent=1 // pred_fallthru
      _
    // Predicated region
    $region22: #{tpu_custom_call.1} parent=1 // pred_check
      _
    $region23: #{tpu_custom_call.1} parent=1 // pred_check_branch
      %57 = sbr.rel (0) target = $region25
    $region24: #{tpu_custom_call.1} parent=1 // pred_region
      %59 = dma.done [#allocation3], 256
    $region25: #{tpu_custom_call.1} parent=1 // pred_fallthru
      _
    // Predicated region
    $region26: #{tpu_custom_call.1} parent=1 // pred_check
      _
    $region27: #{tpu_custom_call.1} parent=1 // pred_check_branch
      %61 = sbr.rel (0) target = $region29
    $region28: #{tpu_custom_call.1} parent=1 // pred_region
      %63 = dma.done [#allocation6], 32
    $region29: #{tpu_custom_call.1} parent=1 // pred_fallthru
      _
    // Predicated region
    $region30: #{tpu_custom_call.1} parent=1 // pred_check
      _
    $region31: #{tpu_custom_call.1} parent=1 // pred_check_branch
      %65 = sbr.rel (0) target = $region33
    $region32: #{tpu_custom_call.1} parent=1 // pred_region
      %67 = dma.done [#allocation6], 2048
    $region33: #{tpu_custom_call.1} parent=1 // pred_fallthru
      _
    %v68 = vld [vmem:[#allocation2] sm:$0xff]
    %v69 = vld [vmem:[#allocation2 + $0x8] sm:$0xff]
    %v70 = vld [vmem:[#allocation7] sm:$0xff]
    %v71 = vld [vmem:[#allocation7 + $0x8] sm:$0xff]
    %v72 = vld [vmem:[#allocation7 + $0x10] sm:$0xff]
    %v73 = vld [vmem:[#allocation7 + $0x18] sm:$0xff]
    %v74 = vld [vmem:[#allocation7 + $0x20] sm:$0xff]
    %v75 = vld [vmem:[#allocation7 + $0x28] sm:$0xff]
    %v76 = vld [vmem:[#allocation7 + $0x30] sm:$0xff]
    %v77 = vld [vmem:[#allocation7 + $0x38] sm:$0xff]
    %v78 = vld [vmem:[#allocation7 + $0x40] sm:$0xff]
    %v79 = vld [vmem:[#allocation7 + $0x48] sm:$0xff]
    %v80 = vld [vmem:[#allocation7 + $0x50] sm:$0xff]
    %v81 = vld [vmem:[#allocation7 + $0x58] sm:$0xff]
    %v82 = vld [vmem:[#allocation7 + $0x60] sm:$0xff]
    %v83 = vld [vmem:[#allocation7 + $0x68] sm:$0xff]
    %v84 = vld [vmem:[#allocation7 + $0x70] sm:$0xff]
    %v85 = vld [vmem:[#allocation7 + $0x78] sm:$0xff]
    %86 = vmatpush.msra.mxu0 %v85
    %87 = vmatpush.msra.mxu0 %v84
    %88 = vmatpush.msra.mxu0 %v83
    %89 = vmatpush.msra.mxu0 %v82
    %90 = vmatpush.msra.mxu0 %v81
    %91 = vmatpush.msra.mxu0 %v80
    %92 = vmatpush.msra.mxu0 %v79
    %93 = vmatpush.msra.mxu0 %v78
    %94 = vmatpush.msra.mxu0 %v77
    %95 = vmatpush.msra.mxu0 %v76
    %96 = vmatpush.msra.mxu0 %v75
    %97 = vmatpush.msra.mxu0 %v74
    %98 = vmatpush.msra.mxu0 %v73
    %99 = vmatpush.msra.mxu0 %v72
    %100 = vmatpush.msra.mxu0 %v71
    %101 = vmatpush.msra.mxu0 %v70
    %102 = vmatmul.f32.gmra.mxu0 %v68
    %v103 = vpop.f32.mrf.mxu0
    %v104 = vadd.f32 0.0, %v103
    %105 = vmatmul.f32.gmra.mxu0 %v69
    %v106 = vpop.f32.mrf.mxu0
    %v107 = vadd.f32 0.0, %v106
    %108 = vdwg.mxu0
    %v109 = vld [vmem:[#allocation5] sm:$0x1]
    %v110 = vld [vmem:[#allocation5 + $0x1] sm:$0x1]
    %v113 = vperm.slane %v109, 0
    %v114 = vperm.slane %v110, 0
    %v117 = vadd.f32 %v104, %v113
    %v118 = vadd.f32 %v107, %v114
    %119 = vadd.xlane.f32.xlu0 %v117
    %v120 = vpop.xlane.xlu0 %119
    %121 = vadd.xlane.f32.xlu0 %v118
    %v122 = vpop.xlane.xlu0 %121
    %v123 = vmul.f32 %v117, %v117
    %v124 = vmul.f32 %v118, %v118
    %125 = vadd.xlane.f32.xlu0 %v123
    %v126 = vpop.xlane.xlu0 %125
    %127 = vadd.xlane.f32.xlu0 %v124
    %v128 = vpop.xlane.xlu0 %127
    %v129 = vmul.f32 %v120, 0.03125
    %v130 = vmul.f32 %v122, 0.03125
    %v131 = vmul.f32 %v126, 0.03125
    %v132 = vmul.f32 %v128, 0.03125
    %v133 = vmul.f32 %v129, %v129
    %v134 = vmul.f32 %v130, %v130
    %v135 = vsub.f32 %v131, %v133
    %v136 = vsub.f32 %v132, %v134
    %v137 = vsub.f32 %v117, %v129
    %v138 = vsub.f32 %v118, %v130
    %v139 = vadd.f32 %v135, 1e-05
    %v140 = vadd.f32 %v136, 1e-05
    %v141 = vrsqrt.pop %v139
    %v142 = vmul.f32 %v141, %v139
    %v143 = vmul.f32 %v142, %v141
    %v144 = vmul.f32 0.5, %v143
    %v145 = vsub.f32 1.5, %v144
    %v146 = vmul.f32 %v141, %v145
    %vm147 = vweird.f32 %v139
    %vm148 = vweird.f32 %v141
    %vm149 = vmor %vm147, %vm148
    %v150 = vsel %vm149, %v141, %v146
    %v151 = vrsqrt.pop %v140
    %v152 = vmul.f32 %v151, %v140
    %v153 = vmul.f32 %v152, %v151
    %v154 = vmul.f32 0.5, %v153
    %v155 = vsub.f32 1.5, %v154
    %v156 = vmul.f32 %v151, %v155
    %vm157 = vweird.f32 %v140
    %vm158 = vweird.f32 %v151
    %vm159 = vmor %vm157, %vm158
    %v160 = vsel %vm159, %v151, %v156
    %v161 = vmul.f32 %v137, %v150
    %v162 = vmul.f32 %v138, %v160
    %v163 = vld [vmem:[%s3] sm:$0x1]
    %v165 = vperm.slane %v163, 0
    %v167 = vmul.f32 %v161, %v165
    %v168 = vmul.f32 %v162, %v165
    %v169 = vld [vmem:[%s4] sm:$0x1]
    %v171 = vperm.slane %v169, 0
    %v173 = vadd.f32 %v167, %v171
    %v174 = vadd.f32 %v168, %v171
    %175 = vst [vmem:[#allocation8] sm:$0xff] %v173
    %176 = vst [vmem:[#allocation8 + $0x8] sm:$0xff] %v174
    // Predicated region
    $region34: #{tpu_custom_call.1} parent=1 // pred_check
      _
    $region35: #{tpu_custom_call.1} parent=1 // pred_check_branch
      %178 = sbr.rel (0) target = $region37
    $region36: #{tpu_custom_call.1} parent=1 // pred_region
      %180 = vsyncadd [#allocation4], 0
      %s181 = sshll.u32 [#allocation8], 4
      %s182 = int_to_ptr.vmem [resolvable:$true] %s181
      %s183 = sshll.u32 %s5, 4
      %s184 = int_to_ptr.hbm [resolvable:$true] %s183
      %189 = dma.vmem_to_hbm [thread:$0]  %s182, 256, %s184, [#allocation4], 128, 128, 8
    $region37: #{tpu_custom_call.1} parent=1 // pred_fallthru
      _
    // Predicated region
    $region38: #{tpu_custom_call.1} parent=1 // pred_check
      _
    $region39: #{tpu_custom_call.1} parent=1 // pred_check_branch
      %191 = sbr.rel (0) target = $region41
    $region40: #{tpu_custom_call.1} parent=1 // pred_region
      %193 = dma.done [#allocation4], 256
    $region41: #{tpu_custom_call.1} parent=1 // pred_fallthru
      _
    %194 = vsyncpa [#allocation3], 1
    %195 = vsyncpa [#allocation6], 1
    %196 = vsyncpa [#allocation4], 1

</llo_original>
